<compile_context>
chip_gen: v6e
topology: v6e:2x2x1
jax: 0.10.0
libtpu: 0.0.40
codegen_flags: <defaults>
</compile_context>

<pallas_src>
import functools

import jax
import jax.numpy as jnp
from jax.experimental import pallas as pl
from jax.experimental.pallas import tpu as pltpu

MAX_LENGTH = 10
LANE = 128           # TPU lane width; every padded feature axis
NEG = -1.0e30        # bias value for padded softmax / log_softmax lanes


def _round_up8(n):
    return ((n + 7) // 8) * 8


def _layout(H, V, ML):
    """Row offsets of each parameter block inside the packed (rows, 128) array."""
    assert 2 * H <= LANE and 3 * H <= LANE and V <= LANE and ML <= LANE, \
        "small-model packing assumes 3H, V, ML all fit in 128 lanes"
    off, r = {}, 0
    off["emb"] = r;  r += _round_up8(V)    # (V, H)      embedding table
    off["attn"] = r; r += LANE             # (2H, ML)    attention Linear (rows 0..2H-1)
    off["comb"] = r; r += LANE             # (2H, H)     attention_combine Linear
    off["wi"] = r;   r += LANE             # (H, 3H)     GRU weight_ih^T  [r|z|n]
    off["wh"] = r;   r += LANE             # (H, 3H)     GRU weight_hh^T  [r|z|n]
    off["wout"] = r; r += LANE             # (H, V)      output Linear
    off["bias"] = r; r += 8                # 5 bias rows (+3 pad rows)
    off["rows"] = r
    return off


def _decode_kernel(n_layers, H, V, off,
                   tok_ref,     # SMEM (num_steps,) int32 : teacher-forced tokens (prefetch)
                   h0_ref,      # VMEM (1,128)    f32 : initial hidden[0], lanes>=H zero
                   enc_ref,     # VMEM (128,128)  f32 : encoder_outputs zero-padded
                   p_ref,       # VMEM (rows,128) f32 : packed parameters
                   out_ref,     # OUT  (8,128)    row0=log-probs row1=hidden row2=attn weights
                   h_scr):      # VMEM (1,128)    f32 : hidden state carried across steps
    f32 = jnp.float32
    step = pl.program_id(0)
    oe, oa, oc = off["emb"], off["attn"], off["comb"]
    oi, oh, oo, ob = off["wi"], off["wh"], off["wout"], off["bias"]

    # --- seed the carried hidden state on the first step ----------------------
    @pl.when(step == 0)
    def _():
        h_scr[...] = h0_ref[...]

    lane = jax.lax.broadcasted_iota(jnp.int32, (1, LANE), 1)
    keep_h = lane < H

    # --- embedding lookup (dropout == identity in eval mode) ------------------
    idx = jnp.clip(tok_ref[step], 0, V - 1)             # clamp: no silent OOB row reads
    e = p_ref[pl.ds(oe + idx, 1), :]                    # (1,128)  [embedded | 0]
    h = h_scr[...]                                      # (1,128)  [hidden   | 0]

    # --- attention weights = softmax(Linear(cat(embedded, hidden[0]))) --------
    cat_eh = e + pltpu.roll(h, H, 1)                    # [e | h | 0 | 0]   (roll = XLU)
    scores = (jnp.dot(cat_eh, p_ref[oa:oa + LANE, :], preferred_element_type=f32)
              + p_ref[ob:ob + 1, :])                    # padded lanes biased to -1e30
    s_max = jnp.max(scores, axis=-1, keepdims=True)
    s_exp = jnp.exp(scores - s_max)                     # padded lanes underflow to 0
    attw = s_exp / jnp.sum(s_exp, axis=-1, keepdims=True)   # exact divide (latency-bound)

    # --- attention applied = attw @ encoder_outputs ---------------------------
    aa = jnp.dot(attw, enc_ref[...], preferred_element_type=f32)   # (1,128) [aa | 0]

    # --- attention_combine(cat(embedded, attention_applied)) ------------------
    cat_ea = e + pltpu.roll(aa, H, 1)                   # [e | aa | 0 | 0]
    x = (jnp.dot(cat_ea, p_ref[oc:oc + LANE, :], preferred_element_type=f32)
         + p_ref[ob + 1:ob + 2, :])                     # (1,128) [x | 0]

    b_i = p_ref[ob + 2:ob + 3, :]                       # fused GRU input bias  [r|z|n|0]
    b_h = p_ref[ob + 3:ob + 4, :]                       # fused GRU hidden bias [r|z|n|0]

    # --- n_layers x (relu -> fused single-step GRU) ----------------------------
    # (same weights every iteration, matching the module's single nn.GRU)
    for _ in range(n_layers):
        xr = jnp.maximum(x, 0.0)
        gi = jnp.dot(xr, p_ref[oi:oi + LANE, :], preferred_element_type=f32) + b_i
        gh = jnp.dot(h, p_ref[oh:oh + LANE, :], preferred_element_type=f32) + b_h
        rz = jax.nn.sigmoid(gi + gh)                    # lanes [0,H)=r, [H,2H)=z
        r_n = pltpu.roll(rz, 2 * H, 1)                  # r aligned onto the n-gate lanes
        nn_ = jnp.tanh(gi + r_n * gh)                   # lanes [2H,3H) = n
        z0 = pltpu.roll(rz, LANE - H, 1)                # z -> lanes [0,H)
        n0 = pltpu.roll(nn_, LANE - 2 * H, 1)           # n -> lanes [0,H)
        h = (1.0 - z0) * n0 + z0 * h                    # pad lanes only hit zero weight rows
        x = h                                           # GRU output == new hidden

    # mask pad lanes ONCE (hoisted out of the loop): next step's roll(h, H)
    # would otherwise wrap the top pad lanes into the embedded lanes of cat_eh.
    h = jnp.where(keep_h, h, 0.0)
    h_scr[...] = h                                      # carry to the next grid step

    # --- output = log_softmax(Linear(h)) ---------------------------------------
    logits = (jnp.dot(h, p_ref[oo:oo + LANE, :], preferred_element_type=f32)
              + p_ref[ob + 4:ob + 5, :])                # padded lanes biased to -1e30
    l_max = jnp.max(logits, axis=-1, keepdims=True)
    shifted = logits - l_max
    lse = jnp.log(jnp.sum(jnp.exp(shifted), axis=-1, keepdims=True))

    # --- single packed (8,128) output block -------------------------------------
    out_ref[...] = jnp.zeros((8, LANE), f32)
    out_ref[0:1, :] = shifted - lse                     # log-probs   (first V lanes valid)
    out_ref[1:2, :] = h                                 # new hidden  (first H lanes valid)
    out_ref[2:3, :] = attw                              # attn weights(first ML lanes valid)


@functools.partial(jax.jit,
                   static_argnames=("hidden_size", "output_size", "max_length", "n_layers"))
def attention_decoder_rnn(pack, tokens, hidden, encoder_outputs, *,
                          hidden_size, output_size, max_length, n_layers=1):
    """Fused teacher-forced decode: one pallas_call runs len(tokens) forward steps.

    tokens: (num_steps,) or (num_steps,1) int32 decoder inputs (num_steps==1 reproduces
            the torch module's single forward call exactly)
    hidden: (1, 1, H) f32 initial hidden state (carried in-kernel across steps)
    encoder_outputs: (ML, H) f32
    returns: (log-probs (num_steps,V), final hidden (1,1,H), attn weights (num_steps,ML))
    """
    H, V, ML = hidden_size, output_size, max_length
    off = _layout(H, V, ML)

    toks = tokens.reshape(-1).astype(jnp.int32)                                    # (num_steps,)
    num_steps = toks.shape[0]
    # loop-invariant padding happens ONCE, outside the decode loop
    h0 = jnp.zeros((1, LANE), jnp.float32).at[:, :H].set(hidden.reshape(1, H))     # (1,128)
    enc = jnp.zeros((LANE, LANE), jnp.float32).at[:ML, :H].set(encoder_outputs)    # (128,128)

    kernel = functools.partial(_decode_kernel, n_layers, H, V, off)

    out = pl.pallas_call(
        kernel,
        out_shape=jax.ShapeDtypeStruct((num_steps, 8, LANE), jnp.float32),
        grid_spec=pltpu.PrefetchScalarGridSpec(
            num_scalar_prefetch=1,                       # tokens live in SMEM
            grid=(num_steps,),
            in_specs=[
                pl.BlockSpec((1, LANE), lambda s, tok: (0, 0)),            # h0   : fetched once
                pl.BlockSpec((LANE, LANE), lambda s, tok: (0, 0)),         # enc  : fetched once
                pl.BlockSpec((off["rows"], LANE), lambda s, tok: (0, 0)),  # pack : fetched once
            ],
            out_specs=pl.BlockSpec((None, 8, LANE), lambda s, tok: (s, 0, 0)),
            scratch_shapes=[pltpu.VMEM((1, LANE), jnp.float32)],           # carried hidden
        ),
        compiler_params=pltpu.CompilerParams(
            dimension_semantics=("arbitrary",)),         # steps are sequentially dependent
    )(toks, h0, enc, pack)

    logp = out[:, 0, :V]                                 # (num_steps, V)
    h_final = out[num_steps - 1, 1, :H].reshape(1, 1, H)
    attw = out[:, 2, :ML]                                # (num_steps, ML)
    return logp, h_final, attw


def init_raw_params(key, hidden_size, output_size, max_length):
    """Synthetic parameters with the exact torch-module shapes."""
    H, V, ML = hidden_size, output_size, max_length
    ks = jax.random.split(key, 10)
    s = 0.1
    return {
        "emb": jax.random.normal(ks[0], (V, H), jnp.float32) * s,          # nn.Embedding(V, H)
        "attn_w": jax.random.normal(ks[1], (ML, 2 * H), jnp.float32) * s,  # Linear(2H, ML)
        "attn_b": jax.random.normal(ks[2], (ML,), jnp.float32) * s,
        "comb_w": jax.random.normal(ks[3], (H, 2 * H), jnp.float32) * s,   # Linear(2H, H)
        "comb_b": jax.random.normal(ks[4], (H,), jnp.float32) * s,
        "w_ih": jax.random.normal(ks[5], (3 * H, H), jnp.float32) * s,     # GRU, gates [r,z,n]
        "w_hh": jax.random.normal(ks[6], (3 * H, H), jnp.float32) * s,
        "b_ih": jax.random.normal(ks[7], (3 * H,), jnp.float32) * s,
        "b_hh": jax.random.normal(ks[8], (3 * H,), jnp.float32) * s,
        "out_w": jax.random.normal(ks[9], (V, H), jnp.float32) * s,        # Linear(H, V)
        "out_b": jnp.zeros((V,), jnp.float32),
    }


def pack_params(raw, hidden_size, output_size, max_length):
    """Pack every weight/bias into one lane-dense (rows, 128) f32 operand."""
    H, V, ML = hidden_size, output_size, max_length
    off = _layout(H, V, ML)
    P = jnp.zeros((off["rows"], LANE), jnp.float32)

    P = P.at[off["emb"]:off["emb"] + V, :H].set(raw["emb"])
    # cat order is (embedded, hidden) -> rows [0,H) of W^T hit embedded, [H,2H) hit hidden
    P = P.at[off["attn"]:off["attn"] + 2 * H, :ML].set(raw["attn_w"].T)
    # cat order is (embedded, attention_applied)
    P = P.at[off["comb"]:off["comb"] + 2 * H, :H].set(raw["comb_w"].T)
    # fused GRU weights: columns ordered [r | z | n], padded to 128 lanes
    P = P.at[off["wi"]:off["wi"] + H, :3 * H].set(raw["w_ih"].T)
    P = P.at[off["wh"]:off["wh"] + H, :3 * H].set(raw["w_hh"].T)
    P = P.at[off["wout"]:off["wout"] + H, :V].set(raw["out_w"].T)

    ob = off["bias"]
    b_attn = jnp.full((LANE,), NEG, jnp.float32).at[:ML].set(raw["attn_b"])
    b_out = jnp.full((LANE,), NEG, jnp.float32).at[:V].set(raw["out_b"])
    P = P.at[ob + 0].set(b_attn)                       # padded scores -> -1e30
    P = P.at[ob + 1, :H].set(raw["comb_b"])
    P = P.at[ob + 2, :3 * H].set(raw["b_ih"])
    P = P.at[ob + 3, :3 * H].set(raw["b_hh"])
    P = P.at[ob + 4].set(b_out)                        # padded logits -> -1e30
    return P


def _reference_step(raw, token, hidden, enc, n_layers=1):
    """Pure-JAX reference of one module forward pass (HIGHEST precision dots)."""
    H = hidden.shape[-1]
    hp = jax.lax.Precision.HIGHEST
    e = raw["emb"][token].reshape(1, H)
    h = hidden.reshape(1, H)
    scores = jnp.dot(jnp.concatenate([e, h], 1), raw["attn_w"].T, precision=hp) + raw["attn_b"]
    attw = jax.nn.softmax(scores, axis=-1)
    aa = jnp.dot(attw, enc, precision=hp)
    x = jnp.dot(jnp.concatenate([e, aa], 1), raw["comb_w"].T, precision=hp) + raw["comb_b"]
    w_i, w_h = raw["w_ih"].T, raw["w_hh"].T
    for _ in range(n_layers):
        xr = jnp.maximum(x, 0.0)
        gi = jnp.dot(xr, w_i, precision=hp) + raw["b_ih"]
        gh = jnp.dot(h, w_h, precision=hp) + raw["b_hh"]
        r = jax.nn.sigmoid(gi[:, :H] + gh[:, :H])
        z = jax.nn.sigmoid(gi[:, H:2 * H] + gh[:, H:2 * H])
        n = jnp.tanh(gi[:, 2 * H:] + r * gh[:, 2 * H:])
        h = (1.0 - z) * n + z * h
        x = h
    logits = jnp.dot(h, raw["out_w"].T, precision=hp) + raw["out_b"]
    return jax.nn.log_softmax(logits, axis=-1), h.reshape(1, 1, H), attw


def _reference_decode(raw, tokens, hidden, enc, n_layers=1):
    """Teacher-forced multi-step reference (hidden carried across steps)."""
    logps, attws = [], []
    h = hidden
    for t in list(tokens.reshape(-1)):
        logp, h, attw = _reference_step(raw, t, h, enc, n_layers)
        logps.append(logp)
        attws.append(attw)
    return jnp.concatenate(logps, 0), h, jnp.concatenate(attws, 0)


if __name__ == "__main__":
    HIDDEN = 32
    OUTPUT = 40          # vocabulary size
    ML = MAX_LENGTH      # 10
    N_LAYERS = 1         # torch.bmm in the reference module requires batch == 1

    key = jax.random.PRNGKey(0)
    k_p, k_h, k_e, k_t = jax.random.split(key, 4)

    raw = init_raw_params(k_p, HIDDEN, OUTPUT, ML)
    pack = pack_params(raw, HIDDEN, OUTPUT, ML)

    hidden = jax.random.normal(k_h, (1, 1, HIDDEN), jnp.float32)          # (1, batch=1, H)
    encoder_outputs = jax.random.normal(k_e, (ML, HIDDEN), jnp.float32)   # (length, H)
    tokens = jax.random.randint(k_t, (ML,), 0, OUTPUT, dtype=jnp.int32)   # teacher-forced feed

    # --- fused decode: ML forward steps in ONE pallas_call ---------------------
    logp, h_new, attw = attention_decoder_rnn(
        pack, tokens, hidden, encoder_outputs,
        hidden_size=HIDDEN, output_size=OUTPUT, max_length=ML, n_layers=N_LAYERS)
    jax.block_until_ready((logp, h_new, attw))

    ref_logp, ref_h, ref_attw = _reference_decode(raw, tokens, hidden, encoder_outputs, N_LAYERS)
    assert jnp.allclose(logp, ref_logp, atol=1e-3, rtol=1e-3), "log_softmax output mismatch"
    assert jnp.allclose(h_new, ref_h, atol=1e-3, rtol=1e-3), "hidden mismatch"
    assert jnp.allclose(attw, ref_attw, atol=1e-3, rtol=1e-3), "attention weights mismatch"

    # --- single-step call == the original torch module forward ------------------
    token1 = tokens[:1].reshape(1, 1)                                     # (batch=1, 1)
    logp1, h1, attw1 = attention_decoder_rnn(
        pack, token1, hidden, encoder_outputs,
        hidden_size=HIDDEN, output_size=OUTPUT, max_length=ML, n_layers=N_LAYERS)
    jax.block_until_ready((logp1, h1, attw1))
    r_logp1, r_h1, r_attw1 = _reference_step(raw, tokens[0], hidden, encoder_outputs, N_LAYERS)
    assert jnp.allclose(logp1, r_logp1, atol=1e-3, rtol=1e-3), "single-step log-probs mismatch"
    assert jnp.allclose(h1, r_h1, atol=1e-3, rtol=1e-3), "single-step hidden mismatch"
    assert jnp.allclose(attw1, r_attw1, atol=1e-3, rtol=1e-3), "single-step attn mismatch"

    print("KERNEL_OK")
</pallas_src>

<mosaic_0001>
module attributes {stable_mosaic.version = 11 : i64} {
  func.func @_decode_kernel(%arg0: i32, %arg1: memref<10xi32, #tpu.memory_space<smem>>, %arg2: memref<1x128xf32, #tpu.memory_space<vmem>>, %arg3: memref<128x128xf32, #tpu.memory_space<vmem>>, %arg4: memref<688x128xf32, #tpu.memory_space<vmem>>, %arg5: memref<1x8x128xf32, #tpu.memory_space<vmem>>, %arg6: memref<1x128xf32, #tpu.memory_space<vmem>>) attributes {dimension_semantics = [#tpu.dimension_semantics<arbitrary>], iteration_bounds = array<i64: 10>, scalar_prefetch = 1 : i64, scratch_operands = 1 : i64, tpu.core_type = #tpu.core_type<tc>, window_params = [{pipeline_mode = #tpu.pipeline_mode<synchronous>, transform_indices = @transform_0, window_bounds = array<i64: 1, 128>}, {pipeline_mode = #tpu.pipeline_mode<synchronous>, transform_indices = @transform_1, window_bounds = array<i64: 128, 128>}, {pipeline_mode = #tpu.pipeline_mode<synchronous>, transform_indices = @transform_2, window_bounds = array<i64: 688, 128>}, {transform_indices = @transform_3, window_bounds = array<i64: 1, 8, 128>}]} {
    %c0_i32 = arith.constant 0 : i32
    %0 = arith.cmpi eq, %arg0, %c0_i32 : i32
    %1 = arith.extui %0 : i1 to i32
    %c0_i32_0 = arith.constant 0 : i32
    %2 = arith.cmpi ne, %1, %c0_i32_0 : i32
    scf.if %2 {
      %c0_46 = arith.constant 0 : index
      %c0_47 = arith.constant 0 : index
      %94 = vector.load %arg2[%c0_46, %c0_47] : memref<1x128xf32, #tpu.memory_space<vmem>>, vector<1x128xf32>
      %c0_48 = arith.constant 0 : index
      %c0_49 = arith.constant 0 : index
      %95 = vector.load %arg6[%c0_48, %c0_49] : memref<1x128xf32, #tpu.memory_space<vmem>>, vector<1x128xf32>
      tpu.vector_store %arg6[%c0_48, %c0_49], %94 {strides = array<i32>} : memref<1x128xf32, #tpu.memory_space<vmem>>, vector<1x128xf32>,
    } else {
    }
    %3 = tpu.iota {dimensions = array<i32: 1>} : vector<1x128xi32>
    %c32_i32 = arith.constant 32 : i32
    %4 = vector.broadcast %c32_i32 : i32 to vector<1x128xi32>
    %5 = arith.cmpi slt, %3, %4 : vector<1x128xi32>
    %6 = arith.index_cast %arg0 : i32 to index
    %7 = memref.load %arg1[%6] : memref<10xi32, #tpu.memory_space<smem>>
    %c0_i32_1 = arith.constant 0 : i32
    %c39_i32 = arith.constant 39 : i32
    %8 = arith.maxsi %c0_i32_1, %7 : i32
    %9 = arith.minsi %c39_i32, %8 : i32
    %c0_i32_2 = arith.constant 0 : i32
    %10 = arith.addi %c0_i32_2, %9 : i32
    %11 = arith.index_cast %10 : i32 to index
    %c0 = arith.constant 0 : index
    %12 = vector.load %arg4[%11, %c0] : memref<688x128xf32, #tpu.memory_space<vmem>>, vector<1x128xf32>
    %c0_3 = arith.constant 0 : index
    %c0_4 = arith.constant 0 : index
    %13 = vector.load %arg6[%c0_3, %c0_4] : memref<1x128xf32, #tpu.memory_space<vmem>>, vector<1x128xf32>
    %c32_i32_5 = arith.constant 32 : i32
    %14 = tpu.dynamic_rotate %13 by %c32_i32_5 dim 1 : vector<1x128xf32>, i32 -> vector<1x128xf32>
    %15 = arith.addf %12, %14 : vector<1x128xf32>
    %c40 = arith.constant 40 : index
    %c0_6 = arith.constant 0 : index
    %16 = vector.load %arg4[%c40, %c0_6] : memref<688x128xf32, #tpu.memory_space<vmem>>, vector<128x128xf32>
    %cst = arith.constant dense<0.000000e+00> : vector<1x128xf32>
    %17 = tpu.matmul %15, %16, %cst {dimension_numbers = #tpu.dot_dimension_numbers<[1], [0], [0], [1], [0, 0, 1, 1], [], []>} : vector<1x128xf32>, vector<128x128xf32>, vector<1x128xf32> -> vector<1x128xf32>
    %c680 = arith.constant 680 : index
    %c0_7 = arith.constant 0 : index
    %18 = vector.load %arg4[%c680, %c0_7] : memref<688x128xf32, #tpu.memory_space<vmem>>, vector<1x128xf32>
    %19 = arith.addf %17, %18 : vector<1x128xf32>
    %cst_8 = arith.constant dense<0xFF800000> : vector<1xf32>
    %20 = vector.multi_reduction <maximumf>, %19, %cst_8 [1] : vector<1x128xf32> to vector<1xf32>
    %21 = vector.shape_cast %20 : vector<1xf32> to vector<1x1xf32>
    %22 = vector.broadcast %21 : vector<1x1xf32> to vector<1x128xf32>
    %23 = arith.subf %19, %22 : vector<1x128xf32>
    %24 = math.exp %23 : vector<1x128xf32>
    %cst_9 = arith.constant dense<0.000000e+00> : vector<1xf32>
    %25 = vector.multi_reduction <add>, %24, %cst_9 [1] : vector<1x128xf32> to vector<1xf32>
    %26 = vector.shape_cast %25 : vector<1xf32> to vector<1x1xf32>
    %27 = vector.broadcast %26 : vector<1x1xf32> to vector<1x128xf32>
    %28 = arith.divf %24, %27 : vector<1x128xf32>
    %c0_10 = arith.constant 0 : index
    %c0_11 = arith.constant 0 : index
    %29 = vector.load %arg3[%c0_10, %c0_11] : memref<128x128xf32, #tpu.memory_space<vmem>>, vector<128x128xf32>
    %cst_12 = arith.constant dense<0.000000e+00> : vector<1x128xf32>
    %30 = tpu.matmul %28, %29, %cst_12 {dimension_numbers = #tpu.dot_dimension_numbers<[1], [0], [0], [1], [0, 0, 1, 1], [], []>} : vector<1x128xf32>, vector<128x128xf32>, vector<1x128xf32> -> vector<1x128xf32>
    %c32_i32_13 = arith.constant 32 : i32
    %31 = tpu.dynamic_rotate %30 by %c32_i32_13 dim 1 : vector<1x128xf32>, i32 -> vector<1x128xf32>
    %32 = arith.addf %12, %31 : vector<1x128xf32>
    %c168 = arith.constant 168 : index
    %c0_14 = arith.constant 0 : index
    %33 = vector.load %arg4[%c168, %c0_14] : memref<688x128xf32, #tpu.memory_space<vmem>>, vector<128x128xf32>
    %cst_15 = arith.constant dense<0.000000e+00> : vector<1x128xf32>
    %34 = tpu.matmul %32, %33, %cst_15 {dimension_numbers = #tpu.dot_dimension_numbers<[1], [0], [0], [1], [0, 0, 1, 1], [], []>} : vector<1x128xf32>, vector<128x128xf32>, vector<1x128xf32> -> vector<1x128xf32>
    %c681 = arith.constant 681 : index
    %c0_16 = arith.constant 0 : index
    %35 = vector.load %arg4[%c681, %c0_16] : memref<688x128xf32, #tpu.memory_space<vmem>>, vector<1x128xf32>
    %36 = arith.addf %34, %35 : vector<1x128xf32>
    %c682 = arith.constant 682 : index
    %c0_17 = arith.constant 0 : index
    %37 = vector.load %arg4[%c682, %c0_17] : memref<688x128xf32, #tpu.memory_space<vmem>>, vector<1x128xf32>
    %c683 = arith.constant 683 : index
    %c0_18 = arith.constant 0 : index
    %38 = vector.load %arg4[%c683, %c0_18] : memref<688x128xf32, #tpu.memory_space<vmem>>, vector<1x128xf32>
    %cst_19 = arith.constant 0.000000e+00 : f32
    %39 = vector.broadcast %cst_19 : f32 to vector<1x128xf32>
    %40 = arith.maximumf %36, %39 : vector<1x128xf32>
    %c296 = arith.constant 296 : index
    %c0_20 = arith.constant 0 : index
    %41 = vector.load %arg4[%c296, %c0_20] : memref<688x128xf32, #tpu.memory_space<vmem>>, vector<128x128xf32>
    %cst_21 = arith.constant dense<0.000000e+00> : vector<1x128xf32>
    %42 = tpu.matmul %40, %41, %cst_21 {dimension_numbers = #tpu.dot_dimension_numbers<[1], [0], [0], [1], [0, 0, 1, 1], [], []>} : vector<1x128xf32>, vector<128x128xf32>, vector<1x128xf32> -> vector<1x128xf32>
    %43 = arith.addf %42, %37 : vector<1x128xf32>
    %c424 = arith.constant 424 : index
    %c0_22 = arith.constant 0 : index
    %44 = vector.load %arg4[%c424, %c0_22] : memref<688x128xf32, #tpu.memory_space<vmem>>, vector<128x128xf32>
    %cst_23 = arith.constant dense<0.000000e+00> : vector<1x128xf32>
    %45 = tpu.matmul %13, %44, %cst_23 {dimension_numbers = #tpu.dot_dimension_numbers<[1], [0], [0], [1], [0, 0, 1, 1], [], []>} : vector<1x128xf32>, vector<128x128xf32>, vector<1x128xf32> -> vector<1x128xf32>
    %46 = arith.addf %45, %38 : vector<1x128xf32>
    %47 = arith.addf %43, %46 : vector<1x128xf32>
    %48 = arith.negf %47 : vector<1x128xf32>
    %49 = math.exp %48 : vector<1x128xf32>
    %cst_24 = arith.constant 1.000000e+00 : f32
    %50 = vector.broadcast %cst_24 : f32 to vector<1x128xf32>
    %51 = arith.addf %50, %49 : vector<1x128xf32>
    %52 = arith.divf %50, %51 : vector<1x128xf32>
    %c64_i32 = arith.constant 64 : i32
    %53 = tpu.dynamic_rotate %52 by %c64_i32 dim 1 : vector<1x128xf32>, i32 -> vector<1x128xf32>
    %54 = arith.mulf %53, %46 : vector<1x128xf32>
    %55 = arith.addf %43, %54 : vector<1x128xf32>
    %56 = math.tanh %55 : vector<1x128xf32>
    %c96_i32 = arith.constant 96 : i32
    %57 = tpu.dynamic_rotate %52 by %c96_i32 dim 1 : vector<1x128xf32>, i32 -> vector<1x128xf32>
    %c64_i32_25 = arith.constant 64 : i32
    %58 = tpu.dynamic_rotate %56 by %c64_i32_25 dim 1 : vector<1x128xf32>, i32 -> vector<1x128xf32>
    %cst_26 = arith.constant 1.000000e+00 : f32
    %59 = vector.broadcast %cst_26 : f32 to vector<1x128xf32>
    %60 = arith.subf %59, %57 : vector<1x128xf32>
    %61 = arith.mulf %60, %58 : vector<1x128xf32>
    %62 = arith.mulf %57, %13 : vector<1x128xf32>
    %63 = arith.addf %61, %62 : vector<1x128xf32>
    %cst_27 = arith.constant 0.000000e+00 : f32
    %64 = vector.broadcast %cst_27 : f32 to vector<1x128xf32>
    %65 = arith.select %5, %63, %64 : vector<1x128xi1>, vector<1x128xf32>
    %c0_28 = arith.constant 0 : index
    %c0_29 = arith.constant 0 : index
    %66 = vector.load %arg6[%c0_28, %c0_29] : memref<1x128xf32, #tpu.memory_space<vmem>>, vector<1x128xf32>
    tpu.vector_store %arg6[%c0_28, %c0_29], %65 {strides = array<i32>} : memref<1x128xf32, #tpu.memory_space<vmem>>, vector<1x128xf32>,
    %c552 = arith.constant 552 : index
    %c0_30 = arith.constant 0 : index
    %67 = vector.load %arg4[%c552, %c0_30] : memref<688x128xf32, #tpu.memory_space<vmem>>, vector<128x128xf32>
    %cst_31 = arith.constant dense<0.000000e+00> : vector<1x128xf32>
    %68 = tpu.matmul %65, %67, %cst_31 {dimension_numbers = #tpu.dot_dimension_numbers<[1], [0], [0], [1], [0, 0, 1, 1], [], []>} : vector<1x128xf32>, vector<128x128xf32>, vector<1x128xf32> -> vector<1x128xf32>
    %c684 = arith.constant 684 : index
    %c0_32 = arith.constant 0 : index
    %69 = vector.load %arg4[%c684, %c0_32] : memref<688x128xf32, #tpu.memory_space<vmem>>, vector<1x128xf32>
    %70 = arith.addf %68, %69 : vector<1x128xf32>
    %cst_33 = arith.constant dense<0xFF800000> : vector<1xf32>
    %71 = vector.multi_reduction <maximumf>, %70, %cst_33 [1] : vector<1x128xf32> to vector<1xf32>
    %72 = vector.shape_cast %71 : vector<1xf32> to vector<1x1xf32>
    %73 = vector.broadcast %72 : vector<1x1xf32> to vector<1x128xf32>
    %74 = arith.subf %70, %73 : vector<1x128xf32>
    %75 = math.exp %74 : vector<1x128xf32>
    %cst_34 = arith.constant dense<0.000000e+00> : vector<1xf32>
    %76 = vector.multi_reduction <add>, %75, %cst_34 [1] : vector<1x128xf32> to vector<1xf32>
    %77 = vector.shape_cast %76 : vector<1xf32> to vector<1x1xf32>
    %78 = math.log %77 : vector<1x1xf32>
    %cst_35 = arith.constant 0.000000e+00 : f32
    %79 = vector.broadcast %cst_35 : f32 to vector<8x128xf32>
    %c0_36 = arith.constant 0 : index
    %c0_37 = arith.constant 0 : index
    %c0_38 = arith.constant 0 : index
    %80 = vector.load %arg5[%c0_36, %c0_37, %c0_38] : memref<1x8x128xf32, #tpu.memory_space<vmem>>, vector<1x8x128xf32>
    %81 = vector.shape_cast %80 : vector<1x8x128xf32> to vector<8x128xf32>
    %82 = vector.shape_cast %79 : vector<8x128xf32> to vector<1x8x128xf32>
    tpu.vector_store %arg5[%c0_36, %c0_37, %c0_38], %82 {strides = array<i32>} : memref<1x8x128xf32, #tpu.memory_space<vmem>>, vector<1x8x128xf32>,
    %83 = vector.broadcast %78 : vector<1x1xf32> to vector<1x128xf32>
    %84 = arith.subf %74, %83 : vector<1x128xf32>
    %c0_39 = arith.constant 0 : index
    %c0_40 = arith.constant 0 : index
    %c0_41 = arith.constant 0 : index
    %85 = vector.load %arg5[%c0_39, %c0_40, %c0_41] : memref<1x8x128xf32, #tpu.memory_space<vmem>>, vector<1x1x128xf32>
    %86 = vector.shape_cast %85 : vector<1x1x128xf32> to vector<1x128xf32>
    %87 = vector.shape_cast %84 : vector<1x128xf32> to vector<1x1x128xf32>
    tpu.vector_store %arg5[%c0_39, %c0_40, %c0_41], %87 {strides = array<i32>} : memref<1x8x128xf32, #tpu.memory_space<vmem>>, vector<1x1x128xf32>,
    %c0_42 = arith.constant 0 : index
    %c1 = arith.constant 1 : index
    %c0_43 = arith.constant 0 : index
    %88 = vector.load %arg5[%c0_42, %c1, %c0_43] : memref<1x8x128xf32, #tpu.memory_space<vmem>>, vector<1x1x128xf32>
    %89 = vector.shape_cast %88 : vector<1x1x128xf32> to vector<1x128xf32>
    %90 = vector.shape_cast %65 : vector<1x128xf32> to vector<1x1x128xf32>
    tpu.vector_store %arg5[%c0_42, %c1, %c0_43], %90 {strides = array<i32>} : memref<1x8x128xf32, #tpu.memory_space<vmem>>, vector<1x1x128xf32>,
    %c0_44 = arith.constant 0 : index
    %c2 = arith.constant 2 : index
    %c0_45 = arith.constant 0 : index
    %91 = vector.load %arg5[%c0_44, %c2, %c0_45] : memref<1x8x128xf32, #tpu.memory_space<vmem>>, vector<1x1x128xf32>
    %92 = vector.shape_cast %91 : vector<1x1x128xf32> to vector<1x128xf32>
    %93 = vector.shape_cast %28 : vector<1x128xf32> to vector<1x1x128xf32>
    tpu.vector_store %arg5[%c0_44, %c2, %c0_45], %93 {strides = array<i32>} : memref<1x8x128xf32, #tpu.memory_space<vmem>>, vector<1x1x128xf32>,
    return
  }
  func.func @transform_0(%arg0: i32, %arg1: memref<10xi32, #tpu.memory_space<smem>>) -> (i32, i32) {
    %c0_i32 = arith.constant 0 : i32
    %c0_i32_0 = arith.constant 0 : i32
    %c0_i32_1 = arith.constant 0 : i32
    return %c0_i32, %c0_i32_0 : i32, i32
  }
  func.func @transform_1(%arg0: i32, %arg1: memref<10xi32, #tpu.memory_space<smem>>) -> (i32, i32) {
    %c0_i32 = arith.constant 0 : i32
    %c0_i32_0 = arith.constant 0 : i32
    %c0_i32_1 = arith.constant 0 : i32
    return %c0_i32, %c0_i32_0 : i32, i32
  }
  func.func @transform_2(%arg0: i32, %arg1: memref<10xi32, #tpu.memory_space<smem>>) -> (i32, i32) {
    %c0_i32 = arith.constant 0 : i32
    %c0_i32_0 = arith.constant 0 : i32
    %c0_i32_1 = arith.constant 0 : i32
    return %c0_i32, %c0_i32_0 : i32, i32
  }
  func.func @transform_3(%arg0: i32, %arg1: memref<10xi32, #tpu.memory_space<smem>>) -> (i32, i32, i32) {
    %c0_i32 = arith.constant 0 : i32
    %c0_i32_0 = arith.constant 0 : i32
    %c0_i32_1 = arith.constant 0 : i32
    return %arg0, %c0_i32, %c0_i32_0 : i32, i32, i32
  }
}

</mosaic_0001>

<llo_original>
// kernel: attention_decoder_rnn.1
$region0: #{attention_decoder_rnn.1}
  #allocation0 [shape = 'u32[]', space=smem, size = 0x4, offset = 0x4, fixed_abs, tag = 'smem constant byte address 0x4 - core index']
  #allocation1 [shape = 'u32[144,128]{1,0:T(1,128)}', space=vmem, size = 0x12000, scoped, tag = 'internal scratch']
  #allocation2 [shape = 'f32[1,128]{1,0:T(1,128)}', space=vmem, size = 0x200, scoped, tag = 'scratch operand']
  #allocation3 [shape = 's32[1]{0}', space=sflag, size = 0x4, scoped, tag = 'scoped memory for attention_decoder_rnn.1']
  #allocation4 [shape = 'u8[512]{0}', space=smem, size = 0x200, scoped, tag = 'prefetched SMEM operand 0']
  %s0 = inlined_call_operand.vmem [shape: s32[10], index: 0, kind: input, shape index: {}]
  %s1 = inlined_call_operand.vmem [shape: f32[1,128], index: 1, kind: input, shape index: {}]
  %s2 = inlined_call_operand.vmem [shape: f32[128,128], index: 2, kind: input, shape index: {}]
  %s3 = inlined_call_operand.hbm [shape: f32[688,128], index: 3, kind: input, shape index: {}]
  %s4 = inlined_call_operand.vmem [shape: f32[10,8,128], index: 4, kind: output, shape index: {}]
  %s5 = sld [smem:[#allocation0]]
  $region53: #{attention_decoder_rnn.1} parent=0
    _
  %s7 = ssub.s32 1, %s5
  %s8 = scalar_select 0, %s7, %s5
  %s9 = sshll.u32 %s0, 4
  %s10 = int_to_ptr.vmem [resolvable:$true] %s9
  %12 = dma.vmem_to_smem %s10, 16, [#allocation4], [#allocation3]
  %13 = dma.done [#allocation3], 16
  %14 = sfence
  $region1: #{attention_decoder_rnn.1} parent=0
    #allocation5 [shape = 'u8[352256]{0}', space=vmem, size = 0x56000, scoped, tag = 'input window, operand 3, single buffered']
    #allocation6 [shape = 's32[2]{0}', space=sflag, size = 0x8, scoped, tag = 'scoped memory for attention_decoder_rnn.1']
    %15 = vsyncpa [#allocation6], 0
    loop: start=0, step=1, limit=12
    $region2: #{attention_decoder_rnn.1} parent=1 // loop_pre_header
      _
    $region3: #{attention_decoder_rnn.1} parent=1 // loop_header
      %s17 = sphi 0, %s21
      %p18 = scmp.ge.s32.totalorder %s17, 12
      %s25 = sphi 0, %s25
      %s27 = sphi 0, %s25
      %s28 = sphi 0, %s27
      %s42 = sphi 0, %s28
      %s46 = sphi 0, %s46
      %s48 = sphi 0, %s46
      %s49 = sphi 0, %s48
      %s63 = sphi 0, %s49
      %s67 = sphi 0, %s67
      %s69 = sphi 0, %s67
      %s70 = sphi 0, %s69
      %s84 = sphi 0, %s70
      %s90 = sphi 0, %s92
      %s93 = sphi 0, %s90
      %s94 = sphi 0, %s93
      %s110 = sphi 0, %s94
    $region4: #{attention_decoder_rnn.1} parent=1 // loop_header_branch
      %20 = sbr.rel (%p18) target = $region8
    $region5: #{attention_decoder_rnn.1} parent=1 // loop_body
      %s22 = ssub.s32 %s17, 1
      %s23 = ssub.s32 %s17, 2
      %s24 = sadd.s32 %s17, 1
      %s26 = sadd.s32 %s25, 1
      %p29 = scmp.eq.s32.totalorder %s17, 9
      %p30 = scmp.ne.s32.totalorder %s25, %s27
      %p31 = scmp.eq.s32.totalorder %s17, 0
      %p32 = por %p30, %p31
      %p33 = scmp.ne.s32.totalorder %s25, %s27
      %p34 = scmp.eq.s32.totalorder %s22, 9
      %p35 = por %p33, %p34
      %p36 = scmp.ne.s32.totalorder %s27, %s28
      %p37 = scmp.eq.s32.totalorder %s22, 0
      %p38 = por %p36, %p37
      %p39 = scmp.ne.s32.totalorder %s27, %s28
      %p40 = scmp.eq.s32.totalorder %s23, 9
      %p41 = por %p39, %p40
      %p43 = scmp.ne.s32.totalorder %s28, %s42
      %p44 = scmp.eq.s32.totalorder %s23, 0
      %p45 = por %p43, %p44
      %s47 = sadd.s32 %s46, 1
      %p50 = scmp.eq.s32.totalorder %s17, 9
      %p51 = scmp.ne.s32.totalorder %s46, %s48
      %p52 = scmp.eq.s32.totalorder %s17, 0
      %p53 = por %p51, %p52
      %p54 = scmp.ne.s32.totalorder %s46, %s48
      %p55 = scmp.eq.s32.totalorder %s22, 9
      %p56 = por %p54, %p55
      %p57 = scmp.ne.s32.totalorder %s48, %s49
      %p58 = scmp.eq.s32.totalorder %s22, 0
      %p59 = por %p57, %p58
      %p60 = scmp.ne.s32.totalorder %s48, %s49
      %p61 = scmp.eq.s32.totalorder %s23, 9
      %p62 = por %p60, %p61
      %p64 = scmp.ne.s32.totalorder %s49, %s63
      %p65 = scmp.eq.s32.totalorder %s23, 0
      %p66 = por %p64, %p65
      %s68 = sadd.s32 %s67, 1
      %p71 = scmp.eq.s32.totalorder %s17, 9
      %p72 = scmp.ne.s32.totalorder %s67, %s69
      %p73 = scmp.eq.s32.totalorder %s17, 0
      %p74 = por %p72, %p73
      %p75 = scmp.ne.s32.totalorder %s67, %s69
      %p76 = scmp.eq.s32.totalorder %s22, 9
      %p77 = por %p75, %p76
      %p78 = scmp.ne.s32.totalorder %s69, %s70
      %p79 = scmp.eq.s32.totalorder %s22, 0
      %p80 = por %p78, %p79
      %p81 = scmp.ne.s32.totalorder %s69, %s70
      %p82 = scmp.eq.s32.totalorder %s23, 9
      %p83 = por %p81, %p82
      %p85 = scmp.ne.s32.totalorder %s70, %s84
      %p86 = scmp.eq.s32.totalorder %s23, 0
      %p87 = por %p85, %p86
      %s88 = ssub.s32 %s17, %s24
      %p89 = scmp.eq.s32.totalorder %s88, 0
      %s91 = sadd.s32 %s90, 1
      %s92 = scalar_select %p89, %s90, %s91
      %p95 = pneg %p89
      %p96 = scmp.eq.s32.totalorder %s17, 9
      %p97 = por %p95, %p96
      %p98 = scmp.ne.s32.totalorder %s90, %s93
      %p99 = scmp.eq.s32.totalorder %s17, 0
      %p100 = por %p98, %p99
      %p101 = scmp.ne.s32.totalorder %s90, %s93
      %p102 = scmp.eq.s32.totalorder %s22, 9
      %p103 = por %p101, %p102
      %p104 = scmp.ne.s32.totalorder %s93, %s94
      %p105 = scmp.eq.s32.totalorder %s22, 0
      %p106 = por %p104, %p105
      %p107 = scmp.ne.s32.totalorder %s93, %s94
      %p108 = scmp.eq.s32.totalorder %s23, 9
      %p109 = por %p107, %p108
      %p111 = scmp.ne.s32.totalorder %s94, %s110
      %p112 = scmp.eq.s32.totalorder %s23, 0
      %p113 = por %p111, %p112
      %p114 = scmp.le.s32.totalorder 1, %s17
      %p115 = scmp.lt.s32.totalorder %s17, 11
      %p116 = pnand %p114, %p115
      %p117 = pneg %p116
      // Predicated region
      $region9: #{attention_decoder_rnn.1} parent=5 // pred_check
        _
      $region10: #{attention_decoder_rnn.1} parent=5 // pred_check_branch
        %119 = sbr.rel (%p116) target = $region12
      $region11: #{attention_decoder_rnn.1} parent=5 // pred_region
        %s120 = ssub.s32 %s17, 1
        // Predicated region
        $region13: #{attention_decoder_rnn.1} parent=11 // pred_check
          %p121 = pneg %p38
        $region14: #{attention_decoder_rnn.1} parent=11 // pred_check_branch
          %123 = sbr.rel (%p121) target = $region16
        $region15: #{attention_decoder_rnn.1} parent=11 // pred_region
          _
        $region16: #{attention_decoder_rnn.1} parent=11 // pred_fallthru
          _
        // Predicated region
        $region17: #{attention_decoder_rnn.1} parent=11 // pred_check
          %p124 = pneg %p59
        $region18: #{attention_decoder_rnn.1} parent=11 // pred_check_branch
          %126 = sbr.rel (%p124) target = $region20
        $region19: #{attention_decoder_rnn.1} parent=11 // pred_region
          _
        $region20: #{attention_decoder_rnn.1} parent=11 // pred_fallthru
          _
        // Predicated region
        $region21: #{attention_decoder_rnn.1} parent=11 // pred_check
          %p127 = pneg %p80
        $region22: #{attention_decoder_rnn.1} parent=11 // pred_check_branch
          %129 = sbr.rel (%p127) target = $region24
        $region23: #{attention_decoder_rnn.1} parent=11 // pred_region
          %s131 = ssub.s32 11008, 11008
          %132 = vsyncadd [#allocation6], %s131
          %s133 = sshll.u32 [#allocation5], 4
          %s134 = int_to_ptr.vmem [resolvable:$true] %s133
          %139 = dma.hbm_to_vmem [thread:$0]  %s3, 11008, %s134, [#allocation6], 128, 128, 8
        $region24: #{attention_decoder_rnn.1} parent=11 // pred_fallthru
          _
      $region12: #{attention_decoder_rnn.1} parent=5 // pred_fallthru
        _
      %p140 = scmp.lt.s32.totalorder %s17, 10
      // Predicated region
      $region25: #{attention_decoder_rnn.1} parent=5 // pred_check
        %p141 = pneg %p140
      $region26: #{attention_decoder_rnn.1} parent=5 // pred_check_branch
        %143 = sbr.rel (%p141) target = $region28
      $region27: #{attention_decoder_rnn.1} parent=5 // pred_region
        _
      $region28: #{attention_decoder_rnn.1} parent=5 // pred_fallthru
        _
      %p144 = scmp.le.s32.totalorder 1, %s17
      %p145 = scmp.lt.s32.totalorder %s17, 11
      %p146 = pnand %p144, %p145
      %p147 = pneg %p146
      // Predicated region
      $region29: #{attention_decoder_rnn.1} parent=5 // pred_check
        _
      $region30: #{attention_decoder_rnn.1} parent=5 // pred_check_branch
        %149 = sbr.rel (%p146) target = $region32
      $region31: #{attention_decoder_rnn.1} parent=5 // pred_region
        %s150 = ssub.s32 %s17, 1
        // Predicated region
        $region33: #{attention_decoder_rnn.1} parent=31 // pred_check
          %p151 = pneg %p80
        $region34: #{attention_decoder_rnn.1} parent=31 // pred_check_branch
          %153 = sbr.rel (%p151) target = $region36
        $region35: #{attention_decoder_rnn.1} parent=31 // pred_region
          %154 = dma.done [#allocation6], 11008
        $region36: #{attention_decoder_rnn.1} parent=31 // pred_fallthru
          _
        %p155 = pneg %p38
        %p156 = pneg %p35
        %p157 = pneg %p59
        %p158 = pneg %p56
        %p159 = pneg %p80
        %p160 = pneg %p77
        %p161 = pneg %p106
        %p162 = pneg %p103
        %p163 = scmp.lt.s32.totalorder %s22, 9
        %s164 = scalar_select %p163, %s22, 9
        %s165 = smul.addr %s164, 8
        %s166 = scalar_lea.vmem %s4, %s165
        %p167 = scmp.lt.s32.totalorder %s22, 9
        %s168 = scalar_select %p167, %s22, 9
        %s169 = smul.addr %s168, 8
        %s170 = scalar_lea.vmem %s4, %s169
        %p171 = scmp.eq.s32.totalorder %s22, 0
        // Predicated region
        $region37: #{attention_decoder_rnn.1} parent=31 // pred_check
          %p172 = pneg %p171
        $region38: #{attention_decoder_rnn.1} parent=31 // pred_check_branch
          %174 = sbr.rel (%p172) target = $region40
        $region39: #{attention_decoder_rnn.1} parent=31 // pred_region
          %v175 = vld [vmem:[%s1] sm:$0x1]
          %176 = vst [vmem:[#allocation2] sm:$0x1] %v175
        $region40: #{attention_decoder_rnn.1} parent=31 // pred_fallthru
          _
        %v177 = vlaneseq
        %v178 = vand.u32 %v177, 127
        %vm179 = vcmp.lt.s32.totalorder %v178, 32
        %s180 = sld [smem:[#allocation4 + %s22]]
        %p181 = scmp.gt.s32.totalorder %s180, 0
        %s182 = scalar_select %p181, %s180, 0
        %p183 = scmp.lt.s32.totalorder %s182, 39
        %s184 = scalar_select %p183, %s182, 39
        %s185 = scalar_lea.vmem [#allocation5], %s184
        %v186 = vld [vmem:[%s185] sm:$0x1]
        %v187 = vld [vmem:[#allocation2] sm:$0x1]
        %188 = vrot.lane.b32.xlu0 %v187, 32
        %v189 = vpop.permute.xlu0 %188
        %v190 = vadd.f32 %v186, %v189
        %v191 = vld [vmem:[#allocation5 + $0x28] sm:$0xff]
        %v192 = vld [vmem:[#allocation5 + $0x30] sm:$0xff]
        %v193 = vld [vmem:[#allocation5 + $0x38] sm:$0xff]
        %v194 = vld [vmem:[#allocation5 + $0x40] sm:$0xff]
        %v195 = vld [vmem:[#allocation5 + $0x48] sm:$0xff]
        %v196 = vld [vmem:[#allocation5 + $0x50] sm:$0xff]
        %v197 = vld [vmem:[#allocation5 + $0x58] sm:$0xff]
        %v198 = vld [vmem:[#allocation5 + $0x60] sm:$0xff]
        %v199 = vld [vmem:[#allocation5 + $0x68] sm:$0xff]
        %v200 = vld [vmem:[#allocation5 + $0x70] sm:$0xff]
        %v201 = vld [vmem:[#allocation5 + $0x78] sm:$0xff]
        %v202 = vld [vmem:[#allocation5 + $0x80] sm:$0xff]
        %v203 = vld [vmem:[#allocation5 + $0x88] sm:$0xff]
        %v204 = vld [vmem:[#allocation5 + $0x90] sm:$0xff]
        %v205 = vld [vmem:[#allocation5 + $0x98] sm:$0xff]
        %v206 = vld [vmem:[#allocation5 + $0xa0] sm:$0xff]
        %v207 = vld [vmem:[#allocation5 + $0x2a8] sm:$0x1]
        %208 = vmatprep.subr.mxu0 0.0
        %209 = vmatpush1.msra.mxu0 %v206
        %210 = vmatprep.subr.mxu0 0.0
        %211 = vmatpush1.msra.mxu0 %v205
        %212 = vmatprep.subr.mxu0 0.0
        %213 = vmatpush1.msra.mxu0 %v204
        %214 = vmatprep.subr.mxu0 0.0
        %215 = vmatpush1.msra.mxu0 %v203
        %216 = vmatprep.subr.mxu0 0.0
        %217 = vmatpush1.msra.mxu0 %v202
        %218 = vmatprep.subr.mxu0 0.0
        %219 = vmatpush1.msra.mxu0 %v201
        %220 = vmatprep.subr.mxu0 0.0
        %221 = vmatpush1.msra.mxu0 %v200
        %222 = vmatprep.subr.mxu0 0.0
        %223 = vmatpush1.msra.mxu0 %v199
        %224 = vmatprep.subr.mxu0 0.0
        %225 = vmatpush1.msra.mxu0 %v198
        %226 = vmatprep.subr.mxu0 0.0
        %227 = vmatpush1.msra.mxu0 %v197
        %228 = vmatprep.subr.mxu0 0.0
        %229 = vmatpush1.msra.mxu0 %v196
        %230 = vmatprep.subr.mxu0 0.0
        %231 = vmatpush1.msra.mxu0 %v195
        %232 = vmatprep.subr.mxu0 0.0
        %233 = vmatpush1.msra.mxu0 %v194
        %234 = vmatprep.subr.mxu0 0.0
        %235 = vmatpush1.msra.mxu0 %v193
        %236 = vmatprep.subr.mxu0 0.0
        %237 = vmatpush1.msra.mxu0 %v192
        %238 = vmatprep.subr.mxu0 0.0
        %239 = vmatpush1.msra.mxu0 %v191
        %240 = vmatprep.subr.mxu0 0.0
        %241 = vmatpush2.msra.mxu0 0.0
        %242 = vmatprep.subr.mxu0 0.0
        %243 = vmatpush2.msra.mxu0 0.0
        %244 = vmatprep.subr.mxu0 0.0
        %245 = vmatpush2.msra.mxu0 0.0
        %246 = vmatprep.subr.mxu0 0.0
        %247 = vmatpush2.msra.mxu0 0.0
        %248 = vmatprep.subr.mxu0 0.0
        %249 = vmatpush2.msra.mxu0 0.0
        %250 = vmatprep.subr.mxu0 0.0
        %251 = vmatpush2.msra.mxu0 0.0
        %252 = vmatprep.subr.mxu0 0.0
        %253 = vmatpush2.msra.mxu0 0.0
        %254 = vmatprep.subr.mxu0 0.0
        %255 = vmatpush2.msra.mxu0 0.0
        %256 = vmatprep.subr.mxu0 0.0
        %257 = vmatpush2.msra.mxu0 0.0
        %258 = vmatprep.subr.mxu0 0.0
        %259 = vmatpush2.msra.mxu0 0.0
        %260 = vmatprep.subr.mxu0 0.0
        %261 = vmatpush2.msra.mxu0 0.0
        %262 = vmatprep.subr.mxu0 0.0
        %263 = vmatpush2.msra.mxu0 0.0
        %264 = vmatprep.subr.mxu0 0.0
        %265 = vmatpush2.msra.mxu0 0.0
        %266 = vmatprep.subr.mxu0 0.0
        %267 = vmatpush2.msra.mxu0 0.0
        %268 = vmatprep.subr.mxu0 0.0
        %269 = vmatpush2.msra.mxu0 0.0
        %270 = vmatprep.subr.mxu0 0.0
        %271 = vmatpush2.msra.mxu0 0.0
        %272 = vmatprep.mubr.f32.mxu0 0.0
        %273 = vmatmul.mubr.f32.gmra.mxu0 %v190
        %v274 = vpop.f32.mrf.mxu0
        %v275 = vadd.f32 %v207, %v274
        %v276 = vpop.f32.mrf.mxu0
        %277 = vdwg.mxu0
        %vm278 = vcmask 1040384
        %v279 = vsel %vm278, %v275, -inf
        %280 = vmax.xlane.f32.xlu0 %v279
        %v281 = vpop.xlane.xlu0 %280
        %v282 = vsub.f32 %v275, %v281
        %v283 = vmul.f32 %v282, 1.442695
        %v284 = vpow.pop %v283
        %v285 = vsel %vm278, %v284, 0.0
        %286 = vadd.xlane.f32.xlu0 %v285
        %v287 = vpop.xlane.xlu0 %286
        %v288 = vrcp.pop %v287
        %v289 = vmul.f32 %v284, %v288
        %v290 = vld [vmem:[%s2] sm:$0xff]
        %v291 = vld [vmem:[%s2 + $0x8] sm:$0xff]
        %v292 = vld [vmem:[%s2 + $0x10] sm:$0xff]
        %v293 = vld [vmem:[%s2 + $0x18] sm:$0xff]
        %v294 = vld [vmem:[%s2 + $0x20] sm:$0xff]
        %v295 = vld [vmem:[%s2 + $0x28] sm:$0xff]
        %v296 = vld [vmem:[%s2 + $0x30] sm:$0xff]
        %v297 = vld [vmem:[%s2 + $0x38] sm:$0xff]
        %v298 = vld [vmem:[%s2 + $0x40] sm:$0xff]
        %v299 = vld [vmem:[%s2 + $0x48] sm:$0xff]
        %v300 = vld [vmem:[%s2 + $0x50] sm:$0xff]
        %v301 = vld [vmem:[%s2 + $0x58] sm:$0xff]
        %v302 = vld [vmem:[%s2 + $0x60] sm:$0xff]
        %v303 = vld [vmem:[%s2 + $0x68] sm:$0xff]
        %v304 = vld [vmem:[%s2 + $0x70] sm:$0xff]
        %v305 = vld [vmem:[%s2 + $0x78] sm:$0xff]
        %306 = vmatprep.subr.mxu0 0.0
        %307 = vmatpush1.msra.mxu0 %v305
        %308 = vmatprep.subr.mxu0 0.0
        %309 = vmatpush1.msra.mxu0 %v304
        %310 = vmatprep.subr.mxu0 0.0
        %311 = vmatpush1.msra.mxu0 %v303
        %312 = vmatprep.subr.mxu0 0.0
        %313 = vmatpush1.msra.mxu0 %v302
        %314 = vmatprep.subr.mxu0 0.0
        %315 = vmatpush1.msra.mxu0 %v301
        %316 = vmatprep.subr.mxu0 0.0
        %317 = vmatpush1.msra.mxu0 %v300
        %318 = vmatprep.subr.mxu0 0.0
        %319 = vmatpush1.msra.mxu0 %v299
        %320 = vmatprep.subr.mxu0 0.0
        %321 = vmatpush1.msra.mxu0 %v298
        %322 = vmatprep.subr.mxu0 0.0
        %323 = vmatpush1.msra.mxu0 %v297
        %324 = vmatprep.subr.mxu0 0.0
        %325 = vmatpush1.msra.mxu0 %v296
        %326 = vmatprep.subr.mxu0 0.0
        %327 = vmatpush1.msra.mxu0 %v295
        %328 = vmatprep.subr.mxu0 0.0
        %329 = vmatpush1.msra.mxu0 %v294
        %330 = vmatprep.subr.mxu0 0.0
        %331 = vmatpush1.msra.mxu0 %v293
        %332 = vmatprep.subr.mxu0 0.0
        %333 = vmatpush1.msra.mxu0 %v292
        %334 = vmatprep.subr.mxu0 0.0
        %335 = vmatpush1.msra.mxu0 %v291
        %336 = vmatprep.subr.mxu0 0.0
        %337 = vmatpush1.msra.mxu0 %v290
        %338 = vmatprep.subr.mxu0 0.0
        %339 = vmatpush2.msra.mxu0 0.0
        %340 = vmatprep.subr.mxu0 0.0
        %341 = vmatpush2.msra.mxu0 0.0
        %342 = vmatprep.subr.mxu0 0.0
        %343 = vmatpush2.msra.mxu0 0.0
        %344 = vmatprep.subr.mxu0 0.0
        %345 = vmatpush2.msra.mxu0 0.0
        %346 = vmatprep.subr.mxu0 0.0
        %347 = vmatpush2.msra.mxu0 0.0
        %348 = vmatprep.subr.mxu0 0.0
        %349 = vmatpush2.msra.mxu0 0.0
        %350 = vmatprep.subr.mxu0 0.0
        %351 = vmatpush2.msra.mxu0 0.0
        %352 = vmatprep.subr.mxu0 0.0
        %353 = vmatpush2.msra.mxu0 0.0
        %354 = vmatprep.subr.mxu0 0.0
        %355 = vmatpush2.msra.mxu0 0.0
        %356 = vmatprep.subr.mxu0 0.0
        %357 = vmatpush2.msra.mxu0 0.0
        %358 = vmatprep.subr.mxu0 0.0
        %359 = vmatpush2.msra.mxu0 0.0
        %360 = vmatprep.subr.mxu0 0.0
        %361 = vmatpush2.msra.mxu0 0.0
        %362 = vmatprep.subr.mxu0 0.0
        %363 = vmatpush2.msra.mxu0 0.0
        %364 = vmatprep.subr.mxu0 0.0
        %365 = vmatpush2.msra.mxu0 0.0
        %366 = vmatprep.subr.mxu0 0.0
        %367 = vmatpush2.msra.mxu0 0.0
        %368 = vmatprep.subr.mxu0 0.0
        %369 = vmatpush2.msra.mxu0 0.0
        %370 = vmatprep.mubr.f32.mxu0 0.0
        %371 = vmatmul.mubr.f32.gmra.mxu0 %v289
        %v372 = vpop.f32.mrf.mxu0
        %v373 = vadd.f32 0.0, %v372
        %v374 = vpop.f32.mrf.mxu0
        %375 = vdwg.mxu0
        %376 = vrot.lane.b32.xlu0 %v373, 32
        %v377 = vpop.permute.xlu0 %376
        %v378 = vadd.f32 %v186, %v377
        %v379 = vld [vmem:[#allocation5 + $0xa8] sm:$0xff]
        %v380 = vld [vmem:[#allocation5 + $0xb0] sm:$0xff]
        %v381 = vld [vmem:[#allocation5 + $0xb8] sm:$0xff]
        %v382 = vld [vmem:[#allocation5 + $0xc0] sm:$0xff]
        %v383 = vld [vmem:[#allocation5 + $0xc8] sm:$0xff]
        %v384 = vld [vmem:[#allocation5 + $0xd0] sm:$0xff]
        %v385 = vld [vmem:[#allocation5 + $0xd8] sm:$0xff]
        %v386 = vld [vmem:[#allocation5 + $0xe0] sm:$0xff]
        %v387 = vld [vmem:[#allocation5 + $0xe8] sm:$0xff]
        %v388 = vld [vmem:[#allocation5 + $0xf0] sm:$0xff]
        %v389 = vld [vmem:[#allocation5 + $0xf8] sm:$0xff]
        %v390 = vld [vmem:[#allocation5 + $0x100] sm:$0xff]
        %v391 = vld [vmem:[#allocation5 + $0x108] sm:$0xff]
        %v392 = vld [vmem:[#allocation5 + $0x110] sm:$0xff]
        %v393 = vld [vmem:[#allocation5 + $0x118] sm:$0xff]
        %v394 = vld [vmem:[#allocation5 + $0x120] sm:$0xff]
        %v395 = vld [vmem:[#allocation5 + $0x2a9] sm:$0x1]
        %396 = vmatprep.subr.mxu0 0.0
        %397 = vmatpush1.msra.mxu0 %v394
        %398 = vmatprep.subr.mxu0 0.0
        %399 = vmatpush1.msra.mxu0 %v393
        %400 = vmatprep.subr.mxu0 0.0
        %401 = vmatpush1.msra.mxu0 %v392
        %402 = vmatprep.subr.mxu0 0.0
        %403 = vmatpush1.msra.mxu0 %v391
        %404 = vmatprep.subr.mxu0 0.0
        %405 = vmatpush1.msra.mxu0 %v390
        %406 = vmatprep.subr.mxu0 0.0
        %407 = vmatpush1.msra.mxu0 %v389
        %408 = vmatprep.subr.mxu0 0.0
        %409 = vmatpush1.msra.mxu0 %v388
        %410 = vmatprep.subr.mxu0 0.0
        %411 = vmatpush1.msra.mxu0 %v387
        %412 = vmatprep.subr.mxu0 0.0
        %413 = vmatpush1.msra.mxu0 %v386
        %414 = vmatprep.subr.mxu0 0.0
        %415 = vmatpush1.msra.mxu0 %v385
        %416 = vmatprep.subr.mxu0 0.0
        %417 = vmatpush1.msra.mxu0 %v384
        %418 = vmatprep.subr.mxu0 0.0
        %419 = vmatpush1.msra.mxu0 %v383
        %420 = vmatprep.subr.mxu0 0.0
        %421 = vmatpush1.msra.mxu0 %v382
        %422 = vmatprep.subr.mxu0 0.0
        %423 = vmatpush1.msra.mxu0 %v381
        %424 = vmatprep.subr.mxu0 0.0
        %425 = vmatpush1.msra.mxu0 %v380
        %426 = vmatprep.subr.mxu0 0.0
        %427 = vmatpush1.msra.mxu0 %v379
        %428 = vmatprep.subr.mxu0 0.0
        %429 = vmatpush2.msra.mxu0 0.0
        %430 = vmatprep.subr.mxu0 0.0
        %431 = vmatpush2.msra.mxu0 0.0
        %432 = vmatprep.subr.mxu0 0.0
        %433 = vmatpush2.msra.mxu0 0.0
        %434 = vmatprep.subr.mxu0 0.0
        %435 = vmatpush2.msra.mxu0 0.0
        %436 = vmatprep.subr.mxu0 0.0
        %437 = vmatpush2.msra.mxu0 0.0
        %438 = vmatprep.subr.mxu0 0.0
        %439 = vmatpush2.msra.mxu0 0.0
        %440 = vmatprep.subr.mxu0 0.0
        %441 = vmatpush2.msra.mxu0 0.0
        %442 = vmatprep.subr.mxu0 0.0
        %443 = vmatpush2.msra.mxu0 0.0
        %444 = vmatprep.subr.mxu0 0.0
        %445 = vmatpush2.msra.mxu0 0.0
        %446 = vmatprep.subr.mxu0 0.0
        %447 = vmatpush2.msra.mxu0 0.0
        %448 = vmatprep.subr.mxu0 0.0
        %449 = vmatpush2.msra.mxu0 0.0
        %450 = vmatprep.subr.mxu0 0.0
        %451 = vmatpush2.msra.mxu0 0.0
        %452 = vmatprep.subr.mxu0 0.0
        %453 = vmatpush2.msra.mxu0 0.0
        %454 = vmatprep.subr.mxu0 0.0
        %455 = vmatpush2.msra.mxu0 0.0
        %456 = vmatprep.subr.mxu0 0.0
        %457 = vmatpush2.msra.mxu0 0.0
        %458 = vmatprep.subr.mxu0 0.0
        %459 = vmatpush2.msra.mxu0 0.0
        %460 = vmatprep.mubr.f32.mxu0 0.0
        %461 = vmatmul.mubr.f32.gmra.mxu0 %v378
        %v462 = vpop.f32.mrf.mxu0
        %v463 = vadd.f32 %v395, %v462
        %v464 = vpop.f32.mrf.mxu0
        %465 = vdwg.mxu0
        %v466 = vld [vmem:[#allocation5 + $0x2aa] sm:$0x1]
        %v467 = vld [vmem:[#allocation5 + $0x2ab] sm:$0x1]
        %v468 = vmax.f32 %v463, 0.0
        %v469 = vld [vmem:[#allocation5 + $0x128] sm:$0xff]
        %v470 = vld [vmem:[#allocation5 + $0x130] sm:$0xff]
        %v471 = vld [vmem:[#allocation5 + $0x138] sm:$0xff]
        %v472 = vld [vmem:[#allocation5 + $0x140] sm:$0xff]
        %v473 = vld [vmem:[#allocation5 + $0x148] sm:$0xff]
        %v474 = vld [vmem:[#allocation5 + $0x150] sm:$0xff]
        %v475 = vld [vmem:[#allocation5 + $0x158] sm:$0xff]
        %v476 = vld [vmem:[#allocation5 + $0x160] sm:$0xff]
        %v477 = vld [vmem:[#allocation5 + $0x168] sm:$0xff]
        %v478 = vld [vmem:[#allocation5 + $0x170] sm:$0xff]
        %v479 = vld [vmem:[#allocation5 + $0x178] sm:$0xff]
        %v480 = vld [vmem:[#allocation5 + $0x180] sm:$0xff]
        %v481 = vld [vmem:[#allocation5 + $0x188] sm:$0xff]
        %v482 = vld [vmem:[#allocation5 + $0x190] sm:$0xff]
        %v483 = vld [vmem:[#allocation5 + $0x198] sm:$0xff]
        %v484 = vld [vmem:[#allocation5 + $0x1a0] sm:$0xff]
        %485 = vmatprep.subr.mxu0 0.0
        %486 = vmatpush1.msra.mxu0 %v484
        %487 = vmatprep.subr.mxu0 0.0
        %488 = vmatpush1.msra.mxu0 %v483
        %489 = vmatprep.subr.mxu0 0.0
        %490 = vmatpush1.msra.mxu0 %v482
        %491 = vmatprep.subr.mxu0 0.0
        %492 = vmatpush1.msra.mxu0 %v481
        %493 = vmatprep.subr.mxu0 0.0
        %494 = vmatpush1.msra.mxu0 %v480
        %495 = vmatprep.subr.mxu0 0.0
        %496 = vmatpush1.msra.mxu0 %v479
        %497 = vmatprep.subr.mxu0 0.0
        %498 = vmatpush1.msra.mxu0 %v478
        %499 = vmatprep.subr.mxu0 0.0
        %500 = vmatpush1.msra.mxu0 %v477
        %501 = vmatprep.subr.mxu0 0.0
        %502 = vmatpush1.msra.mxu0 %v476
        %503 = vmatprep.subr.mxu0 0.0
        %504 = vmatpush1.msra.mxu0 %v475
        %505 = vmatprep.subr.mxu0 0.0
        %506 = vmatpush1.msra.mxu0 %v474
        %507 = vmatprep.subr.mxu0 0.0
        %508 = vmatpush1.msra.mxu0 %v473
        %509 = vmatprep.subr.mxu0 0.0
        %510 = vmatpush1.msra.mxu0 %v472
        %511 = vmatprep.subr.mxu0 0.0
        %512 = vmatpush1.msra.mxu0 %v471
        %513 = vmatprep.subr.mxu0 0.0
        %514 = vmatpush1.msra.mxu0 %v470
        %515 = vmatprep.subr.mxu0 0.0
        %516 = vmatpush1.msra.mxu0 %v469
        %517 = vmatprep.subr.mxu0 0.0
        %518 = vmatpush2.msra.mxu0 0.0
        %519 = vmatprep.subr.mxu0 0.0
        %520 = vmatpush2.msra.mxu0 0.0
        %521 = vmatprep.subr.mxu0 0.0
        %522 = vmatpush2.msra.mxu0 0.0
        %523 = vmatprep.subr.mxu0 0.0
        %524 = vmatpush2.msra.mxu0 0.0
        %525 = vmatprep.subr.mxu0 0.0
        %526 = vmatpush2.msra.mxu0 0.0
        %527 = vmatprep.subr.mxu0 0.0
        %528 = vmatpush2.msra.mxu0 0.0
        %529 = vmatprep.subr.mxu0 0.0
        %530 = vmatpush2.msra.mxu0 0.0
        %531 = vmatprep.subr.mxu0 0.0
        %532 = vmatpush2.msra.mxu0 0.0
        %533 = vmatprep.subr.mxu0 0.0
        %534 = vmatpush2.msra.mxu0 0.0
        %535 = vmatprep.subr.mxu0 0.0
        %536 = vmatpush2.msra.mxu0 0.0
        %537 = vmatprep.subr.mxu0 0.0
        %538 = vmatpush2.msra.mxu0 0.0
        %539 = vmatprep.subr.mxu0 0.0
        %540 = vmatpush2.msra.mxu0 0.0
        %541 = vmatprep.subr.mxu0 0.0
        %542 = vmatpush2.msra.mxu0 0.0
        %543 = vmatprep.subr.mxu0 0.0
        %544 = vmatpush2.msra.mxu0 0.0
        %545 = vmatprep.subr.mxu0 0.0
        %546 = vmatpush2.msra.mxu0 0.0
        %547 = vmatprep.subr.mxu0 0.0
        %548 = vmatpush2.msra.mxu0 0.0
        %549 = vmatprep.mubr.f32.mxu0 0.0
        %550 = vmatmul.mubr.f32.gmra.mxu0 %v468
        %v551 = vpop.f32.mrf.mxu0
        %v552 = vadd.f32 %v466, %v551
        %v553 = vpop.f32.mrf.mxu0
        %554 = vdwg.mxu0
        %v555 = vld [vmem:[#allocation5 + $0x1a8] sm:$0xff]
        %v556 = vld [vmem:[#allocation5 + $0x1b0] sm:$0xff]
        %v557 = vld [vmem:[#allocation5 + $0x1b8] sm:$0xff]
        %v558 = vld [vmem:[#allocation5 + $0x1c0] sm:$0xff]
        %v559 = vld [vmem:[#allocation5 + $0x1c8] sm:$0xff]
        %v560 = vld [vmem:[#allocation5 + $0x1d0] sm:$0xff]
        %v561 = vld [vmem:[#allocation5 + $0x1d8] sm:$0xff]
        %v562 = vld [vmem:[#allocation5 + $0x1e0] sm:$0xff]
        %v563 = vld [vmem:[#allocation5 + $0x1e8] sm:$0xff]
        %v564 = vld [vmem:[#allocation5 + $0x1f0] sm:$0xff]
        %v565 = vld [vmem:[#allocation5 + $0x1f8] sm:$0xff]
        %v566 = vld [vmem:[#allocation5 + $0x200] sm:$0xff]
        %v567 = vld [vmem:[#allocation5 + $0x208] sm:$0xff]
        %v568 = vld [vmem:[#allocation5 + $0x210] sm:$0xff]
        %v569 = vld [vmem:[#allocation5 + $0x218] sm:$0xff]
        %v570 = vld [vmem:[#allocation5 + $0x220] sm:$0xff]
        %571 = vmatprep.subr.mxu0 0.0
        %572 = vmatpush1.msra.mxu0 %v570
        %573 = vmatprep.subr.mxu0 0.0
        %574 = vmatpush1.msra.mxu0 %v569
        %575 = vmatprep.subr.mxu0 0.0
        %576 = vmatpush1.msra.mxu0 %v568
        %577 = vmatprep.subr.mxu0 0.0
        %578 = vmatpush1.msra.mxu0 %v567
        %579 = vmatprep.subr.mxu0 0.0
        %580 = vmatpush1.msra.mxu0 %v566
        %581 = vmatprep.subr.mxu0 0.0
        %582 = vmatpush1.msra.mxu0 %v565
        %583 = vmatprep.subr.mxu0 0.0
        %584 = vmatpush1.msra.mxu0 %v564
        %585 = vmatprep.subr.mxu0 0.0
        %586 = vmatpush1.msra.mxu0 %v563
        %587 = vmatprep.subr.mxu0 0.0
        %588 = vmatpush1.msra.mxu0 %v562
        %589 = vmatprep.subr.mxu0 0.0
        %590 = vmatpush1.msra.mxu0 %v561
        %591 = vmatprep.subr.mxu0 0.0
        %592 = vmatpush1.msra.mxu0 %v560
        %593 = vmatprep.subr.mxu0 0.0
        %594 = vmatpush1.msra.mxu0 %v559
        %595 = vmatprep.subr.mxu0 0.0
        %596 = vmatpush1.msra.mxu0 %v558
        %597 = vmatprep.subr.mxu0 0.0
        %598 = vmatpush1.msra.mxu0 %v557
        %599 = vmatprep.subr.mxu0 0.0
        %600 = vmatpush1.msra.mxu0 %v556
        %601 = vmatprep.subr.mxu0 0.0
        %602 = vmatpush1.msra.mxu0 %v555
        %603 = vmatprep.subr.mxu0 0.0
        %604 = vmatpush2.msra.mxu0 0.0
        %605 = vmatprep.subr.mxu0 0.0
        %606 = vmatpush2.msra.mxu0 0.0
        %607 = vmatprep.subr.mxu0 0.0
        %608 = vmatpush2.msra.mxu0 0.0
        %609 = vmatprep.subr.mxu0 0.0
        %610 = vmatpush2.msra.mxu0 0.0
        %611 = vmatprep.subr.mxu0 0.0
        %612 = vmatpush2.msra.mxu0 0.0
        %613 = vmatprep.subr.mxu0 0.0
        %614 = vmatpush2.msra.mxu0 0.0
        %615 = vmatprep.subr.mxu0 0.0
        %616 = vmatpush2.msra.mxu0 0.0
        %617 = vmatprep.subr.mxu0 0.0
        %618 = vmatpush2.msra.mxu0 0.0
        %619 = vmatprep.subr.mxu0 0.0
        %620 = vmatpush2.msra.mxu0 0.0
        %621 = vmatprep.subr.mxu0 0.0
        %622 = vmatpush2.msra.mxu0 0.0
        %623 = vmatprep.subr.mxu0 0.0
        %624 = vmatpush2.msra.mxu0 0.0
        %625 = vmatprep.subr.mxu0 0.0
        %626 = vmatpush2.msra.mxu0 0.0
        %627 = vmatprep.subr.mxu0 0.0
        %628 = vmatpush2.msra.mxu0 0.0
        %629 = vmatprep.subr.mxu0 0.0
        %630 = vmatpush2.msra.mxu0 0.0
        %631 = vmatprep.subr.mxu0 0.0
        %632 = vmatpush2.msra.mxu0 0.0
        %633 = vmatprep.subr.mxu0 0.0
        %634 = vmatpush2.msra.mxu0 0.0
        %635 = vmatprep.mubr.f32.mxu0 0.0
        %636 = vmatmul.mubr.f32.gmra.mxu0 %v187
        %v637 = vpop.f32.mrf.mxu0
        %v638 = vadd.f32 %v467, %v637
        %v639 = vpop.f32.mrf.mxu0
        %640 = vdwg.mxu0
        %v641 = vadd.f32 %v552, %v638
        %v642 = vxor.u32 %v641, 2147483648
        %v643 = vmul.f32 %v642, 1.442695
        %v644 = vpow.pop %v643
        %v645 = vadd.f32 %v644, 1.0
        %v646 = vrcp.pop %v645
        %v647 = vmul.f32 1.0, %v646
        %648 = vrot.lane.b32.xlu0 %v647, 64
        %v649 = vpop.permute.xlu0 %648
        %v650 = vmul.f32 %v649, %v638
        %v651 = vadd.f32 %v552, %v650
        %v652 = vtanh.pop %v651
        %653 = vrot.lane.b32.xlu0 %v647, 96
        %v654 = vpop.permute.xlu0 %653
        %655 = vrot.lane.b32.xlu0 %v652, 64
        %v656 = vpop.permute.xlu0 %655
        %v657 = vsub.f32 1.0, %v654
        %v658 = vmul.f32 %v657, %v656
        %v659 = vmul.f32 %v654, %v187
        %v660 = vadd.f32 %v658, %v659
        %v661 = vsel %vm179, %v660, 0.0
        %662 = vst [vmem:[#allocation2] sm:$0x1] %v661
        %v663 = vld [vmem:[#allocation5 + $0x228] sm:$0xff]
        %v664 = vld [vmem:[#allocation5 + $0x230] sm:$0xff]
        %v665 = vld [vmem:[#allocation5 + $0x238] sm:$0xff]
        %v666 = vld [vmem:[#allocation5 + $0x240] sm:$0xff]
        %v667 = vld [vmem:[#allocation5 + $0x248] sm:$0xff]
        %v668 = vld [vmem:[#allocation5 + $0x250] sm:$0xff]
        %v669 = vld [vmem:[#allocation5 + $0x258] sm:$0xff]
        %v670 = vld [vmem:[#allocation5 + $0x260] sm:$0xff]
        %v671 = vld [vmem:[#allocation5 + $0x268] sm:$0xff]
        %v672 = vld [vmem:[#allocation5 + $0x270] sm:$0xff]
        %v673 = vld [vmem:[#allocation5 + $0x278] sm:$0xff]
        %v674 = vld [vmem:[#allocation5 + $0x280] sm:$0xff]
        %v675 = vld [vmem:[#allocation5 + $0x288] sm:$0xff]
        %v676 = vld [vmem:[#allocation5 + $0x290] sm:$0xff]
        %v677 = vld [vmem:[#allocation5 + $0x298] sm:$0xff]
        %v678 = vld [vmem:[#allocation5 + $0x2a0] sm:$0xff]
        %v679 = vld [vmem:[#allocation5 + $0x2ac] sm:$0x1]
        %680 = vmatprep.subr.mxu0 0.0
        %681 = vmatpush1.msra.mxu0 %v678
        %682 = vmatprep.subr.mxu0 0.0
        %683 = vmatpush1.msra.mxu0 %v677
        %684 = vmatprep.subr.mxu0 0.0
        %685 = vmatpush1.msra.mxu0 %v676
        %686 = vmatprep.subr.mxu0 0.0
        %687 = vmatpush1.msra.mxu0 %v675
        %688 = vmatprep.subr.mxu0 0.0
        %689 = vmatpush1.msra.mxu0 %v674
        %690 = vmatprep.subr.mxu0 0.0
        %691 = vmatpush1.msra.mxu0 %v673
        %692 = vmatprep.subr.mxu0 0.0
        %693 = vmatpush1.msra.mxu0 %v672
        %694 = vmatprep.subr.mxu0 0.0
        %695 = vmatpush1.msra.mxu0 %v671
        %696 = vmatprep.subr.mxu0 0.0
        %697 = vmatpush1.msra.mxu0 %v670
        %698 = vmatprep.subr.mxu0 0.0
        %699 = vmatpush1.msra.mxu0 %v669
        %700 = vmatprep.subr.mxu0 0.0
        %701 = vmatpush1.msra.mxu0 %v668
        %702 = vmatprep.subr.mxu0 0.0
        %703 = vmatpush1.msra.mxu0 %v667
        %704 = vmatprep.subr.mxu0 0.0
        %705 = vmatpush1.msra.mxu0 %v666
        %706 = vmatprep.subr.mxu0 0.0
        %707 = vmatpush1.msra.mxu0 %v665
        %708 = vmatprep.subr.mxu0 0.0
        %709 = vmatpush1.msra.mxu0 %v664
        %710 = vmatprep.subr.mxu0 0.0
        %711 = vmatpush1.msra.mxu0 %v663
        %712 = vmatprep.subr.mxu0 0.0
        %713 = vmatpush2.msra.mxu0 0.0
        %714 = vmatprep.subr.mxu0 0.0
        %715 = vmatpush2.msra.mxu0 0.0
        %716 = vmatprep.subr.mxu0 0.0
        %717 = vmatpush2.msra.mxu0 0.0
        %718 = vmatprep.subr.mxu0 0.0
        %719 = vmatpush2.msra.mxu0 0.0
        %720 = vmatprep.subr.mxu0 0.0
        %721 = vmatpush2.msra.mxu0 0.0
        %722 = vmatprep.subr.mxu0 0.0
        %723 = vmatpush2.msra.mxu0 0.0
        %724 = vmatprep.subr.mxu0 0.0
        %725 = vmatpush2.msra.mxu0 0.0
        %726 = vmatprep.subr.mxu0 0.0
        %727 = vmatpush2.msra.mxu0 0.0
        %728 = vmatprep.subr.mxu0 0.0
        %729 = vmatpush2.msra.mxu0 0.0
        %730 = vmatprep.subr.mxu0 0.0
        %731 = vmatpush2.msra.mxu0 0.0
        %732 = vmatprep.subr.mxu0 0.0
        %733 = vmatpush2.msra.mxu0 0.0
        %734 = vmatprep.subr.mxu0 0.0
        %735 = vmatpush2.msra.mxu0 0.0
        %736 = vmatprep.subr.mxu0 0.0
        %737 = vmatpush2.msra.mxu0 0.0
        %738 = vmatprep.subr.mxu0 0.0
        %739 = vmatpush2.msra.mxu0 0.0
        %740 = vmatprep.subr.mxu0 0.0
        %741 = vmatpush2.msra.mxu0 0.0
        %742 = vmatprep.subr.mxu0 0.0
        %743 = vmatpush2.msra.mxu0 0.0
        %744 = vmatprep.mubr.f32.mxu0 0.0
        %745 = vmatmul.mubr.f32.gmra.mxu0 %v661
        %v746 = vpop.f32.mrf.mxu0
        %v747 = vadd.f32 %v679, %v746
        %v748 = vpop.f32.mrf.mxu0
        %749 = vdwg.mxu0
        %v750 = vsel %vm278, %v747, -inf
        %751 = vmax.xlane.f32.xlu0 %v750
        %v752 = vpop.xlane.xlu0 %751
        %v753 = vsub.f32 %v747, %v752
        %v754 = vmul.f32 %v753, 1.442695
        %v755 = vpow.pop %v754
        %v756 = vsel %vm278, %v755, 0.0
        %757 = vadd.xlane.f32.xlu0 %v756
        %v758 = vpop.xlane.xlu0 %757
        %v759 = vlog2.pop %v758
        %v760 = vmul.f32 %v759, 0.6931472
        %761 = vst [vmem:[%s170] sm:$0xff] 0.0
        %v762 = vsub.f32 %v753, %v760
        %763 = vst [vmem:[%s170] sm:$0x1] %v762
        %764 = vst [vmem:[%s170 + $0x1] sm:$0x1] %v661
        %765 = vst [vmem:[%s170 + $0x2] sm:$0x1] %v289
        %p766 = scmp.lt.s32.totalorder %s22, 9
        %s767 = scalar_select %p766, %s22, 9
        %s768 = smul.addr %s767, 8
        %s769 = scalar_lea.vmem %s4, %s768
        // Predicated region
        $region41: #{attention_decoder_rnn.1} parent=31 // pred_check
          %p770 = pneg %p103
        $region42: #{attention_decoder_rnn.1} parent=31 // pred_check_branch
          %772 = sbr.rel (%p770) target = $region44
        $region43: #{attention_decoder_rnn.1} parent=31 // pred_region
          _
        $region44: #{attention_decoder_rnn.1} parent=31 // pred_fallthru
          _
      $region32: #{attention_decoder_rnn.1} parent=5 // pred_fallthru
        _
      %p773 = scmp.le.s32.totalorder 2, %s17
      // Predicated region
      $region45: #{attention_decoder_rnn.1} parent=5 // pred_check
        %p774 = pneg %p773
      $region46: #{attention_decoder_rnn.1} parent=5 // pred_check_branch
        %776 = sbr.rel (%p774) target = $region48
      $region47: #{attention_decoder_rnn.1} parent=5 // pred_region
        %s777 = ssub.s32 %s17, 2
        // Predicated region
        $region49: #{attention_decoder_rnn.1} parent=47 // pred_check
          %p778 = pneg %p109
        $region50: #{attention_decoder_rnn.1} parent=47 // pred_check_branch
          %780 = sbr.rel (%p778) target = $region52
        $region51: #{attention_decoder_rnn.1} parent=47 // pred_region
          %p781 = scmp.lt.s32.totalorder %s23, 9
          %s782 = scalar_select %p781, %s23, 9
          %s783 = smul.addr %s782, 8
          %s784 = scalar_lea.vmem %s4, %s783
        $region52: #{attention_decoder_rnn.1} parent=47 // pred_fallthru
          _
      $region48: #{attention_decoder_rnn.1} parent=5 // pred_fallthru
        _
    $region6: #{attention_decoder_rnn.1} parent=1 // loop_footer
      %s21 = sadd.s32 1, %s17
    $region7: #{attention_decoder_rnn.1} parent=1 // loop_footer_branch
      %16 = sbr.rel target = $region3
    $region8: #{attention_decoder_rnn.1} parent=1 // loop_exit
      _
    %785 = vsyncpa [#allocation6], 1
    %s786 = scalar_lea.sflag [#allocation6], 1
    %787 = vsyncpa %s786, 1

</llo_original>
